<compile_context>
chip_gen: v7x
topology: tpu7x:2x2x1
jax: 0.10.0
libtpu: 0.0.40
codegen_flags: <defaults>
</compile_context>

<pallas_src>
import functools

import jax
import jax.numpy as jnp
from jax.experimental import pallas as pl
from jax.experimental.pallas import tpu as pltpu

EPS = 1e-5
LANE = 128
SUBLANE = 8

VMEM_LIMIT_BYTES = 48 * 1024 * 1024   # safe on v5e/v6e (128 MiB) and v7x (64 MiB) physical VMEM
FAST_PATH_BYTES = 24 * 1024 * 1024    # conservative live-set budget for the fused single kernel
PIPE_TILE_BYTES = 24 * 1024 * 1024    # budget for the double-buffered row streams per kernel


# --------------------------------------------------------------------------
# Fused single-kernel fast path (whole batch VMEM-resident, f32)
# --------------------------------------------------------------------------
def _fused_net_kernel(n_valid, n_classes,
                      x_ref, w0_ref, b0_ref, g0_ref, be0_ref,
                      w1_ref, b1_ref, g1_ref, be1_ref,
                      w2_ref, b2_ref, o_ref):
    rows = x_ref.shape[0]
    inv_n = 1.0 / n_valid
    rmask = jax.lax.broadcasted_iota(jnp.int32, (rows, 1), 0) < n_valid

    def bn_relu(h, g_ref, be_ref):
        # Full-batch (training-mode) statistics; batch-padding rows masked out.
        hv = jnp.where(rmask, h, 0.0)
        mu = jnp.sum(hv, axis=0, keepdims=True) * inv_n
        var = jnp.sum(hv * hv, axis=0, keepdims=True) * inv_n - mu * mu
        scale = jax.lax.rsqrt(var + EPS) * g_ref[...]
        shift = be_ref[...] - mu * scale
        return jnp.maximum(h * scale + shift, 0.0)

    h0 = jnp.dot(x_ref[...], w0_ref[...], preferred_element_type=jnp.float32) + b0_ref[...]
    y0 = bn_relu(h0, g0_ref, be0_ref)
    h1 = jnp.dot(y0, w1_ref[...], preferred_element_type=jnp.float32) + b1_ref[...]
    y1 = bn_relu(h1, g1_ref, be1_ref)
    logits = jnp.maximum(
        jnp.dot(y1, w2_ref[...], preferred_element_type=jnp.float32) + b2_ref[...], 0.0)

    # Padded class columns would contribute exp(0) to the denominator — mask to -inf.
    col = jax.lax.broadcasted_iota(jnp.int32, (1, logits.shape[1]), 1)
    valid = col < n_classes
    masked = jnp.where(valid, logits, -jnp.inf)
    m = jnp.max(masked, axis=1, keepdims=True)
    lse = jnp.log(jnp.sum(jnp.exp(masked - m), axis=1, keepdims=True)) + m
    o_ref[...] = jnp.where(valid, masked - lse, 0.0).astype(o_ref.dtype)


# --------------------------------------------------------------------------
# 3-kernel pipeline path (large batches, bf16 streams, f32 stats / BN math)
# --------------------------------------------------------------------------
def _fc0_stats_kernel(n_valid, x_ref, w_ref, b_ref, h_ref, sum_ref, sumsq_ref):
    """h0 = x @ W0 + b0 (bf16 store); per-tile partial sum / sumsq of f32 h0."""
    i = pl.program_id(0)
    tb = x_ref.shape[0]

    h = jnp.dot(x_ref[...], w_ref[...], preferred_element_type=jnp.float32) + b_ref[...]
    h_ref[...] = h.astype(h_ref.dtype)

    row = i * tb + jax.lax.broadcasted_iota(jnp.int32, (tb, 1), 0)
    hv = jnp.where(row < n_valid, h, 0.0)
    sum_ref[...] = jnp.sum(hv, axis=0, keepdims=True)[None]
    sumsq_ref[...] = jnp.sum(hv * hv, axis=0, keepdims=True)[None]


def _bn_fc_stats_kernel(n_valid, inv_n,
                        h_in_ref, sum_in_ref, sumsq_in_ref, g_ref, be_ref,
                        w_ref, b_ref,
                        h_out_ref, sum_out_ref, sumsq_out_ref):
    """y = relu(bn(h_in)); h_out = y @ W + b (bf16 store); partial stats of f32 h_out."""
    i = pl.program_id(0)
    tb = h_in_ref.shape[0]

    # Reduce the (nb, 1, width) per-tile partials -> fused BN scale/shift (f32).
    mu = jnp.sum(sum_in_ref[...], axis=0) * inv_n
    var = jnp.sum(sumsq_in_ref[...], axis=0) * inv_n - mu * mu
    scale = jax.lax.rsqrt(var + EPS) * g_ref[...]
    shift = be_ref[...] - mu * scale

    y = jnp.maximum(h_in_ref[...].astype(jnp.float32) * scale + shift, 0.0)
    h = jnp.dot(y.astype(w_ref.dtype), w_ref[...],
                preferred_element_type=jnp.float32) + b_ref[...]
    h_out_ref[...] = h.astype(h_out_ref.dtype)

    row = i * tb + jax.lax.broadcasted_iota(jnp.int32, (tb, 1), 0)
    hv = jnp.where(row < n_valid, h, 0.0)
    sum_out_ref[...] = jnp.sum(hv, axis=0, keepdims=True)[None]
    sumsq_out_ref[...] = jnp.sum(hv * hv, axis=0, keepdims=True)[None]


def _bn_fc_logsoftmax_kernel(inv_n, n_classes,
                             h_in_ref, sum_in_ref, sumsq_in_ref, g_ref, be_ref,
                             w_ref, b_ref, o_ref):
    """y = relu(bn(h_in)); logits = relu(y @ W2 + b2); masked log_softmax."""
    mu = jnp.sum(sum_in_ref[...], axis=0) * inv_n
    var = jnp.sum(sumsq_in_ref[...], axis=0) * inv_n - mu * mu
    scale = jax.lax.rsqrt(var + EPS) * g_ref[...]
    shift = be_ref[...] - mu * scale

    y = jnp.maximum(h_in_ref[...].astype(jnp.float32) * scale + shift, 0.0)
    logits = jnp.maximum(
        jnp.dot(y.astype(w_ref.dtype), w_ref[...],
                preferred_element_type=jnp.float32) + b_ref[...], 0.0)

    col = jax.lax.broadcasted_iota(jnp.int32, (1, logits.shape[1]), 1)
    valid = col < n_classes
    masked = jnp.where(valid, logits, -jnp.inf)
    m = jnp.max(masked, axis=1, keepdims=True)
    lse = jnp.log(jnp.sum(jnp.exp(masked - m), axis=1, keepdims=True)) + m
    o_ref[...] = jnp.where(valid, masked - lse, 0.0).astype(o_ref.dtype)


# --------------------------------------------------------------------------
# Wrapper
# --------------------------------------------------------------------------
def _round_up(n, m):
    return (n + m - 1) // m * m


def _pad2d(a, rows, cols):
    return jnp.pad(a, ((0, rows - a.shape[0]), (0, cols - a.shape[1])))


def net_forward(x, params, *, block_batch=2048, force_pipeline=False):
    """x: any shape flattening to (-1, image_size); params: dict of unpadded weights."""
    w0, b0, g0, be0 = params["w0"], params["b0"], params["g0"], params["be0"]
    w1, b1, g1, be1 = params["w1"], params["b1"], params["g1"], params["be1"]
    w2, b2 = params["w2"], params["b2"]

    image_size = w0.shape[0]
    n_h0, n_h1, n_classes = w0.shape[1], w1.shape[1], w2.shape[1]

    x2d = x.reshape(-1, image_size).astype(jnp.float32)
    n = x2d.shape[0]

    # Lane-dense padded feature dims.
    k_pad = _round_up(image_size, LANE)
    h0_pad = _round_up(n_h0, LANE)
    h1_pad = _round_up(n_h1, LANE)
    c_pad = _round_up(n_classes, LANE)

    f32, bf16 = jnp.float32, jnp.bfloat16

    # Padded parameters (f32 masters; weights cast to bf16 only for the pipeline path).
    w0p, b0p = _pad2d(w0, k_pad, h0_pad), _pad2d(b0, 1, h0_pad)
    g0p, be0p = _pad2d(g0, 1, h0_pad), _pad2d(be0, 1, h0_pad)
    w1p, b1p = _pad2d(w1, h0_pad, h1_pad), _pad2d(b1, 1, h1_pad)
    g1p, be1p = _pad2d(g1, 1, h1_pad), _pad2d(be1, 1, h1_pad)
    w2p, b2p = _pad2d(w2, h1_pad, c_pad), _pad2d(b2, 1, c_pad)

    w_bytes = 4 * (k_pad * h0_pad + h0_pad * h1_pad + h1_pad * c_pad)
    mm_flops_per_row = 2 * (k_pad * h0_pad + h0_pad * h1_pad + h1_pad * c_pad)

    # ---- Fast path: whole batch VMEM-resident, one fused kernel, f32 --------
    n_pad_fast = _round_up(n, SUBLANE)
    fast_live = 4 * n_pad_fast * (k_pad + 3 * (h0_pad + h1_pad + c_pad)) + w_bytes
    if (not force_pipeline) and fast_live <= FAST_PATH_BYTES:
        xp = _pad2d(x2d, n_pad_fast, k_pad)
        out_pad = pl.pallas_call(
            functools.partial(_fused_net_kernel, n, n_classes),
            out_shape=jax.ShapeDtypeStruct((n_pad_fast, c_pad), f32),
            compiler_params=pltpu.CompilerParams(vmem_limit_bytes=VMEM_LIMIT_BYTES),
            cost_estimate=pl.CostEstimate(
                flops=n_pad_fast * mm_flops_per_row + 12 * n_pad_fast * (h0_pad + h1_pad + c_pad),
                transcendentals=n_pad_fast * c_pad + 2 * (h0_pad + h1_pad),
                bytes_accessed=4 * n_pad_fast * (k_pad + c_pad) + w_bytes),
        )(xp, w0p, b0p, g0p, be0p, w1p, b1p, g1p, be1p, w2p, b2p)
        return out_pad[:n, :n_classes]

    # ---- Pipeline path: batch-tiled 3-kernel pipeline, bf16 streams ---------
    inv_n = 1.0 / float(n)

    # Per-row streamed bytes of the heaviest kernel (bf16 in/out, K3 writes f32);
    # x2 for double-buffering.  Clamp the tile so it fits the budget on every chip
    # (v7x has the smallest VMEM).
    per_row = max(2 * (k_pad + h0_pad), 2 * (h0_pad + h1_pad), 2 * h1_pad + 4 * c_pad)
    tb_cap = max(16, (PIPE_TILE_BYTES // (2 * per_row)) // 16 * 16)
    tb = min(_round_up(min(block_batch, n), 16), tb_cap)
    nb = (n + tb - 1) // tb
    n_pad = nb * tb

    xp = _pad2d(x2d, n_pad, k_pad).astype(bf16)
    w0b, w1b, w2b = w0p.astype(bf16), w1p.astype(bf16), w2p.astype(bf16)

    row_spec = lambda width: pl.BlockSpec((tb, width), lambda i: (i, 0))
    const2 = lambda shape: pl.BlockSpec(shape, lambda i: (0, 0))
    const3 = lambda shape: pl.BlockSpec(shape, lambda i: (0, 0, 0))
    stats_spec = lambda width: pl.BlockSpec((1, 1, width), lambda i: (i, 0, 0))

    cparams = pltpu.CompilerParams(dimension_semantics=("parallel",),
                                   vmem_limit_bytes=VMEM_LIMIT_BYTES)

    # K1: h0 = x @ W0 + b0, per-tile partial batch stats of h0.
    h0, sum0, sumsq0 = pl.pallas_call(
        functools.partial(_fc0_stats_kernel, n),
        grid=(nb,),
        in_specs=[row_spec(k_pad), const2((k_pad, h0_pad)), const2((1, h0_pad))],
        out_specs=(row_spec(h0_pad), stats_spec(h0_pad), stats_spec(h0_pad)),
        out_shape=(jax.ShapeDtypeStruct((n_pad, h0_pad), bf16),
                   jax.ShapeDtypeStruct((nb, 1, h0_pad), f32),
                   jax.ShapeDtypeStruct((nb, 1, h0_pad), f32)),
        compiler_params=cparams,
        cost_estimate=pl.CostEstimate(
            flops=2 * n_pad * k_pad * h0_pad + 5 * n_pad * h0_pad,
            transcendentals=0,
            bytes_accessed=2 * (n_pad * k_pad + k_pad * h0_pad + n_pad * h0_pad)),
    )(xp, w0b, b0p)

    # K2: y0 = relu(bn0(h0)); h1 = y0 @ W1 + b1, partial stats of h1.
    h1, sum1, sumsq1 = pl.pallas_call(
        functools.partial(_bn_fc_stats_kernel, n, inv_n),
        grid=(nb,),
        in_specs=[row_spec(h0_pad),
                  const3((nb, 1, h0_pad)), const3((nb, 1, h0_pad)),
                  const2((1, h0_pad)), const2((1, h0_pad)),
                  const2((h0_pad, h1_pad)), const2((1, h1_pad))],
        out_specs=(row_spec(h1_pad), stats_spec(h1_pad), stats_spec(h1_pad)),
        out_shape=(jax.ShapeDtypeStruct((n_pad, h1_pad), bf16),
                   jax.ShapeDtypeStruct((nb, 1, h1_pad), f32),
                   jax.ShapeDtypeStruct((nb, 1, h1_pad), f32)),
        compiler_params=cparams,
        cost_estimate=pl.CostEstimate(
            flops=2 * n_pad * h0_pad * h1_pad + 8 * n_pad * h0_pad + 5 * n_pad * h1_pad,
            transcendentals=nb * h0_pad,
            bytes_accessed=2 * (n_pad * h0_pad + h0_pad * h1_pad + n_pad * h1_pad)),
    )(h0, sum0, sumsq0, g0p, be0p, w1b, b1p)

    # K3: y1 = relu(bn1(h1)); logits = relu(y1 @ W2 + b2); masked log_softmax.
    out_pad = pl.pallas_call(
        functools.partial(_bn_fc_logsoftmax_kernel, inv_n, n_classes),
        grid=(nb,),
        in_specs=[row_spec(h1_pad),
                  const3((nb, 1, h1_pad)), const3((nb, 1, h1_pad)),
                  const2((1, h1_pad)), const2((1, h1_pad)),
                  const2((h1_pad, c_pad)), const2((1, c_pad))],
        out_specs=row_spec(c_pad),
        out_shape=jax.ShapeDtypeStruct((n_pad, c_pad), f32),
        compiler_params=cparams,
        cost_estimate=pl.CostEstimate(
            flops=2 * n_pad * h1_pad * c_pad + 8 * n_pad * h1_pad + 10 * n_pad * c_pad,
            transcendentals=n_pad * (c_pad + 2) + nb * h1_pad,
            bytes_accessed=2 * n_pad * h1_pad + 2 * h1_pad * c_pad + 4 * n_pad * c_pad),
    )(h1, sum1, sumsq1, g1p, be1p, w2b, b2p)

    # Drop batch padding and the padded (lane-filler) class columns.
    return out_pad[:n, :n_classes]


# --------------------------------------------------------------------------
# Params + pure-JAX reference
# --------------------------------------------------------------------------
def init_params(key, image_size):
    """PyTorch-style init: Linear U(-1/sqrt(fan_in), 1/sqrt(fan_in)); BN gamma=1, beta=0.
    Weights stored (in, out); bias/gamma/beta as (1, N)."""
    dims = [(image_size, 100), (100, 50), (50, 10)]
    ks = jax.random.split(key, 6)
    params = {}
    for i, (fi, fo) in enumerate(dims):
        bound = 1.0 / jnp.sqrt(jnp.float32(fi))
        params[f"w{i}"] = jax.random.uniform(ks[2 * i], (fi, fo), jnp.float32, -bound, bound)
        params[f"b{i}"] = jax.random.uniform(ks[2 * i + 1], (1, fo), jnp.float32, -bound, bound)
    params["g0"], params["be0"] = jnp.ones((1, 100), jnp.float32), jnp.zeros((1, 100), jnp.float32)
    params["g1"], params["be1"] = jnp.ones((1, 50), jnp.float32), jnp.zeros((1, 50), jnp.float32)
    return params


def reference_forward(x, params):
    image_size = params["w0"].shape[0]
    h = x.reshape(-1, image_size).astype(jnp.float32)

    def bn_relu(h, g, b):
        mu = jnp.mean(h, axis=0, keepdims=True)
        var = jnp.mean((h - mu) ** 2, axis=0, keepdims=True)
        return jnp.maximum((h - mu) * jax.lax.rsqrt(var + EPS) * g + b, 0.0)

    h = bn_relu(h @ params["w0"] + params["b0"], params["g0"], params["be0"])
    h = bn_relu(h @ params["w1"] + params["b1"], params["g1"], params["be1"])
    logits = jnp.maximum(h @ params["w2"] + params["b2"], 0.0)
    return jax.nn.log_softmax(logits, axis=1)


if __name__ == "__main__":
    B, C, H, W = 8, 1, 16, 16          # image_size = 256
    image_size = C * H * W

    key = jax.random.PRNGKey(0)
    kx, kp, kx2 = jax.random.split(key, 3)
    x = jax.random.normal(kx, (B, C, H, W), jnp.float32)
    params = init_params(kp, image_size)

    # Small batch -> fused single-kernel VMEM-resident fast path (f32, tight tolerance).
    out = jax.block_until_ready(jax.jit(net_forward)(x, params))
    ref = reference_forward(x, params)
    assert out.shape == (B, 10)
    assert jnp.allclose(out, ref, atol=1e-4, rtol=1e-4), "fast-path mismatch vs reference"

    # Larger batch, forced onto the tiled 3-kernel pipeline (bf16 streams, f32 BN math).
    n_big = 600
    xb = jax.random.normal(kx2, (n_big, image_size), jnp.float32)
    pipe_fn = jax.jit(functools.partial(net_forward, block_batch=256, force_pipeline=True))
    out_b = jax.block_until_ready(pipe_fn(xb, params))
    ref_b = reference_forward(xb, params)
    assert out_b.shape == (n_big, 10)
    assert jnp.allclose(out_b, ref_b, atol=5e-2, rtol=5e-2), "pipeline-path mismatch vs reference"

    print("KERNEL_OK")
</pallas_src>

<mosaic_0001>
module attributes {stable_mosaic.version = 11 : i64} {
  func.func @_fused_net_kernel(%arg0: memref<8x256xf32, #tpu.memory_space<vmem>>, %arg1: memref<256x128xf32, #tpu.memory_space<vmem>>, %arg2: memref<1x128xf32, #tpu.memory_space<vmem>>, %arg3: memref<1x128xf32, #tpu.memory_space<vmem>>, %arg4: memref<1x128xf32, #tpu.memory_space<vmem>>, %arg5: memref<128x128xf32, #tpu.memory_space<vmem>>, %arg6: memref<1x128xf32, #tpu.memory_space<vmem>>, %arg7: memref<1x128xf32, #tpu.memory_space<vmem>>, %arg8: memref<1x128xf32, #tpu.memory_space<vmem>>, %arg9: memref<128x128xf32, #tpu.memory_space<vmem>>, %arg10: memref<1x128xf32, #tpu.memory_space<vmem>>, %arg11: memref<8x128xf32, #tpu.memory_space<vmem>>) attributes {dimension_semantics = [], scalar_prefetch = 0 : i64, scratch_operands = 0 : i64, tpu.core_type = #tpu.core_type<tc>} {
    %0 = tpu.iota {dimensions = array<i32: 0>} : vector<8x1xi32>
    %c8_i32 = arith.constant 8 : i32
    %1 = vector.broadcast %c8_i32 : i32 to vector<8x1xi32>
    %2 = arith.cmpi slt, %0, %1 : vector<8x1xi32>
    %c0 = arith.constant 0 : index
    %c0_0 = arith.constant 0 : index
    %3 = vector.load %arg0[%c0, %c0_0] : memref<8x256xf32, #tpu.memory_space<vmem>>, vector<8x256xf32>
    %c0_1 = arith.constant 0 : index
    %c0_2 = arith.constant 0 : index
    %4 = vector.load %arg1[%c0_1, %c0_2] : memref<256x128xf32, #tpu.memory_space<vmem>>, vector<256x128xf32>
    %cst = arith.constant dense<0.000000e+00> : vector<8x128xf32>
    %5 = tpu.matmul %3, %4, %cst {dimension_numbers = #tpu.dot_dimension_numbers<[1], [0], [0], [1], [0, 0, 1, 1], [], []>} : vector<8x256xf32>, vector<256x128xf32>, vector<8x128xf32> -> vector<8x128xf32>
    %c0_3 = arith.constant 0 : index
    %c0_4 = arith.constant 0 : index
    %6 = vector.load %arg2[%c0_3, %c0_4] : memref<1x128xf32, #tpu.memory_space<vmem>>, vector<1x128xf32>
    %7 = vector.broadcast %6 : vector<1x128xf32> to vector<8x128xf32>
    %8 = arith.addf %5, %7 : vector<8x128xf32>
    %cst_5 = arith.constant 0.000000e+00 : f32
    %9 = vector.shape_cast %2 : vector<8x1xi1> to vector<8x1xi1>
    %10 = vector.broadcast %9 : vector<8x1xi1> to vector<8x128xi1>
    %11 = vector.broadcast %cst_5 : f32 to vector<8x128xf32>
    %12 = arith.select %10, %8, %11 : vector<8x128xi1>, vector<8x128xf32>
    %cst_6 = arith.constant dense<0.000000e+00> : vector<128xf32>
    %13 = vector.multi_reduction <add>, %12, %cst_6 [0] : vector<8x128xf32> to vector<128xf32>
    %14 = vector.shape_cast %13 : vector<128xf32> to vector<1x128xf32>
    %cst_7 = arith.constant 1.250000e-01 : f32
    %15 = vector.broadcast %cst_7 : f32 to vector<1x128xf32>
    %16 = arith.mulf %14, %15 : vector<1x128xf32>
    %17 = arith.mulf %12, %12 : vector<8x128xf32>
    %cst_8 = arith.constant dense<0.000000e+00> : vector<128xf32>
    %18 = vector.multi_reduction <add>, %17, %cst_8 [0] : vector<8x128xf32> to vector<128xf32>
    %19 = vector.shape_cast %18 : vector<128xf32> to vector<1x128xf32>
    %cst_9 = arith.constant 1.250000e-01 : f32
    %20 = vector.broadcast %cst_9 : f32 to vector<1x128xf32>
    %21 = arith.mulf %19, %20 : vector<1x128xf32>
    %22 = arith.mulf %16, %16 : vector<1x128xf32>
    %23 = arith.subf %21, %22 : vector<1x128xf32>
    %cst_10 = arith.constant 9.99999974E-6 : f32
    %24 = vector.broadcast %cst_10 : f32 to vector<1x128xf32>
    %25 = arith.addf %23, %24 : vector<1x128xf32>
    %26 = math.rsqrt %25 : vector<1x128xf32>
    %c0_11 = arith.constant 0 : index
    %c0_12 = arith.constant 0 : index
    %27 = vector.load %arg3[%c0_11, %c0_12] : memref<1x128xf32, #tpu.memory_space<vmem>>, vector<1x128xf32>
    %28 = arith.mulf %26, %27 : vector<1x128xf32>
    %c0_13 = arith.constant 0 : index
    %c0_14 = arith.constant 0 : index
    %29 = vector.load %arg4[%c0_13, %c0_14] : memref<1x128xf32, #tpu.memory_space<vmem>>, vector<1x128xf32>
    %30 = arith.mulf %16, %28 : vector<1x128xf32>
    %31 = arith.subf %29, %30 : vector<1x128xf32>
    %32 = vector.broadcast %28 : vector<1x128xf32> to vector<8x128xf32>
    %33 = arith.mulf %8, %32 : vector<8x128xf32>
    %34 = vector.broadcast %31 : vector<1x128xf32> to vector<8x128xf32>
    %35 = arith.addf %33, %34 : vector<8x128xf32>
    %cst_15 = arith.constant 0.000000e+00 : f32
    %36 = vector.broadcast %cst_15 : f32 to vector<8x128xf32>
    %37 = arith.maximumf %35, %36 : vector<8x128xf32>
    %c0_16 = arith.constant 0 : index
    %c0_17 = arith.constant 0 : index
    %38 = vector.load %arg5[%c0_16, %c0_17] : memref<128x128xf32, #tpu.memory_space<vmem>>, vector<128x128xf32>
    %cst_18 = arith.constant dense<0.000000e+00> : vector<8x128xf32>
    %39 = tpu.matmul %37, %38, %cst_18 {dimension_numbers = #tpu.dot_dimension_numbers<[1], [0], [0], [1], [0, 0, 1, 1], [], []>} : vector<8x128xf32>, vector<128x128xf32>, vector<8x128xf32> -> vector<8x128xf32>
    %c0_19 = arith.constant 0 : index
    %c0_20 = arith.constant 0 : index
    %40 = vector.load %arg6[%c0_19, %c0_20] : memref<1x128xf32, #tpu.memory_space<vmem>>, vector<1x128xf32>
    %41 = vector.broadcast %40 : vector<1x128xf32> to vector<8x128xf32>
    %42 = arith.addf %39, %41 : vector<8x128xf32>
    %cst_21 = arith.constant 0.000000e+00 : f32
    %43 = vector.shape_cast %2 : vector<8x1xi1> to vector<8x1xi1>
    %44 = vector.broadcast %43 : vector<8x1xi1> to vector<8x128xi1>
    %45 = vector.broadcast %cst_21 : f32 to vector<8x128xf32>
    %46 = arith.select %44, %42, %45 : vector<8x128xi1>, vector<8x128xf32>
    %cst_22 = arith.constant dense<0.000000e+00> : vector<128xf32>
    %47 = vector.multi_reduction <add>, %46, %cst_22 [0] : vector<8x128xf32> to vector<128xf32>
    %48 = vector.shape_cast %47 : vector<128xf32> to vector<1x128xf32>
    %cst_23 = arith.constant 1.250000e-01 : f32
    %49 = vector.broadcast %cst_23 : f32 to vector<1x128xf32>
    %50 = arith.mulf %48, %49 : vector<1x128xf32>
    %51 = arith.mulf %46, %46 : vector<8x128xf32>
    %cst_24 = arith.constant dense<0.000000e+00> : vector<128xf32>
    %52 = vector.multi_reduction <add>, %51, %cst_24 [0] : vector<8x128xf32> to vector<128xf32>
    %53 = vector.shape_cast %52 : vector<128xf32> to vector<1x128xf32>
    %cst_25 = arith.constant 1.250000e-01 : f32
    %54 = vector.broadcast %cst_25 : f32 to vector<1x128xf32>
    %55 = arith.mulf %53, %54 : vector<1x128xf32>
    %56 = arith.mulf %50, %50 : vector<1x128xf32>
    %57 = arith.subf %55, %56 : vector<1x128xf32>
    %cst_26 = arith.constant 9.99999974E-6 : f32
    %58 = vector.broadcast %cst_26 : f32 to vector<1x128xf32>
    %59 = arith.addf %57, %58 : vector<1x128xf32>
    %60 = math.rsqrt %59 : vector<1x128xf32>
    %c0_27 = arith.constant 0 : index
    %c0_28 = arith.constant 0 : index
    %61 = vector.load %arg7[%c0_27, %c0_28] : memref<1x128xf32, #tpu.memory_space<vmem>>, vector<1x128xf32>
    %62 = arith.mulf %60, %61 : vector<1x128xf32>
    %c0_29 = arith.constant 0 : index
    %c0_30 = arith.constant 0 : index
    %63 = vector.load %arg8[%c0_29, %c0_30] : memref<1x128xf32, #tpu.memory_space<vmem>>, vector<1x128xf32>
    %64 = arith.mulf %50, %62 : vector<1x128xf32>
    %65 = arith.subf %63, %64 : vector<1x128xf32>
    %66 = vector.broadcast %62 : vector<1x128xf32> to vector<8x128xf32>
    %67 = arith.mulf %42, %66 : vector<8x128xf32>
    %68 = vector.broadcast %65 : vector<1x128xf32> to vector<8x128xf32>
    %69 = arith.addf %67, %68 : vector<8x128xf32>
    %cst_31 = arith.constant 0.000000e+00 : f32
    %70 = vector.broadcast %cst_31 : f32 to vector<8x128xf32>
    %71 = arith.maximumf %69, %70 : vector<8x128xf32>
    %c0_32 = arith.constant 0 : index
    %c0_33 = arith.constant 0 : index
    %72 = vector.load %arg9[%c0_32, %c0_33] : memref<128x128xf32, #tpu.memory_space<vmem>>, vector<128x128xf32>
    %cst_34 = arith.constant dense<0.000000e+00> : vector<8x128xf32>
    %73 = tpu.matmul %71, %72, %cst_34 {dimension_numbers = #tpu.dot_dimension_numbers<[1], [0], [0], [1], [0, 0, 1, 1], [], []>} : vector<8x128xf32>, vector<128x128xf32>, vector<8x128xf32> -> vector<8x128xf32>
    %c0_35 = arith.constant 0 : index
    %c0_36 = arith.constant 0 : index
    %74 = vector.load %arg10[%c0_35, %c0_36] : memref<1x128xf32, #tpu.memory_space<vmem>>, vector<1x128xf32>
    %75 = vector.broadcast %74 : vector<1x128xf32> to vector<8x128xf32>
    %76 = arith.addf %73, %75 : vector<8x128xf32>
    %cst_37 = arith.constant 0.000000e+00 : f32
    %77 = vector.broadcast %cst_37 : f32 to vector<8x128xf32>
    %78 = arith.maximumf %76, %77 : vector<8x128xf32>
    %79 = tpu.iota {dimensions = array<i32: 1>} : vector<1x128xi32>
    %c10_i32 = arith.constant 10 : i32
    %80 = vector.broadcast %c10_i32 : i32 to vector<1x128xi32>
    %81 = arith.cmpi slt, %79, %80 : vector<1x128xi32>
    %cst_38 = arith.constant 0xFF800000 : f32
    %82 = vector.shape_cast %81 : vector<1x128xi1> to vector<1x128xi1>
    %83 = vector.broadcast %82 : vector<1x128xi1> to vector<8x128xi1>
    %84 = vector.broadcast %cst_38 : f32 to vector<8x128xf32>
    %85 = arith.select %83, %78, %84 : vector<8x128xi1>, vector<8x128xf32>
    %cst_39 = arith.constant dense<0xFF800000> : vector<8xf32>
    %86 = vector.multi_reduction <maximumf>, %85, %cst_39 [1] : vector<8x128xf32> to vector<8xf32>
    %87 = vector.shape_cast %86 : vector<8xf32> to vector<8x1xf32>
    %88 = vector.broadcast %87 : vector<8x1xf32> to vector<8x128xf32>
    %89 = arith.subf %85, %88 : vector<8x128xf32>
    %90 = math.exp %89 : vector<8x128xf32>
    %cst_40 = arith.constant dense<0.000000e+00> : vector<8xf32>
    %91 = vector.multi_reduction <add>, %90, %cst_40 [1] : vector<8x128xf32> to vector<8xf32>
    %92 = vector.shape_cast %91 : vector<8xf32> to vector<8x1xf32>
    %93 = math.log %92 : vector<8x1xf32>
    %94 = arith.addf %93, %87 : vector<8x1xf32>
    %95 = vector.broadcast %94 : vector<8x1xf32> to vector<8x128xf32>
    %96 = arith.subf %85, %95 : vector<8x128xf32>
    %cst_41 = arith.constant 0.000000e+00 : f32
    %97 = vector.shape_cast %81 : vector<1x128xi1> to vector<1x128xi1>
    %98 = vector.broadcast %97 : vector<1x128xi1> to vector<8x128xi1>
    %99 = vector.broadcast %cst_41 : f32 to vector<8x128xf32>
    %100 = arith.select %98, %96, %99 : vector<8x128xi1>, vector<8x128xf32>
    %c0_42 = arith.constant 0 : index
    %c0_43 = arith.constant 0 : index
    %101 = vector.load %arg11[%c0_42, %c0_43] : memref<8x128xf32, #tpu.memory_space<vmem>>, vector<8x128xf32>
    tpu.vector_store %arg11[%c0_42, %c0_43], %100 {strides = array<i32>} : memref<8x128xf32, #tpu.memory_space<vmem>>, vector<8x128xf32>,
    return
  }
}

</mosaic_0001>

<llo_original>
// kernel: net_forward.1
$region0: #{net_forward.1}
  #allocation0 [shape = 'u32[]', space=smem, size = 0x4, offset = 0x4, fixed_abs, tag = 'smem constant byte address 0x4 - core index']
  #allocation1 [shape = 'u32[144,128]{1,0:T(1,128)}', space=vmem, size = 0x12000, scoped, tag = 'internal scratch']
  %s0 = inlined_call_operand.vmem [shape: f32[8,256], index: 0, kind: input, shape index: {}]
  %s1 = inlined_call_operand.vmem [shape: f32[256,128], index: 1, kind: input, shape index: {}]
  %s2 = inlined_call_operand.vmem [shape: f32[1,128], index: 2, kind: input, shape index: {}]
  %s3 = inlined_call_operand.vmem [shape: f32[1,128], index: 3, kind: input, shape index: {}]
  %s4 = inlined_call_operand.vmem [shape: f32[1,128], index: 4, kind: input, shape index: {}]
  %s5 = inlined_call_operand.vmem [shape: f32[128,128], index: 5, kind: input, shape index: {}]
  %s6 = inlined_call_operand.vmem [shape: f32[1,128], index: 6, kind: input, shape index: {}]
  %s7 = inlined_call_operand.vmem [shape: f32[1,128], index: 7, kind: input, shape index: {}]
  %s8 = inlined_call_operand.vmem [shape: f32[1,128], index: 8, kind: input, shape index: {}]
  %s9 = inlined_call_operand.vmem [shape: f32[128,128], index: 9, kind: input, shape index: {}]
  %s10 = inlined_call_operand.vmem [shape: f32[1,128], index: 10, kind: input, shape index: {}]
  %s11 = inlined_call_operand.hbm [shape: f32[8,128], index: 11, kind: output, shape index: {}]
  %s12 = sld [smem:[#allocation0]]
  $region54: #{net_forward.1} parent=0
    _
  %s14 = ssub.s32 1, %s12
  %s15 = scalar_select 0, %s14, %s12
  $region1: #{net_forward.1} parent=0
    #allocation2 [shape = 'u8[4096]{0}', space=vmem, size = 0x1000, scoped, tag = 'output window, operand 0, single buffered']
    #allocation3 [shape = 's32[1]{0}', space=sflag, size = 0x4, scoped, tag = 'scoped memory for net_forward.1']
    %16 = vsyncpa [#allocation3], 0
    // Predicated region
    $region2: #{net_forward.1} parent=1 // pred_check
      _
    $region3: #{net_forward.1} parent=1 // pred_check_branch
      %18 = sbr.rel (0) target = $region5
    $region4: #{net_forward.1} parent=1 // pred_region
      _
    $region5: #{net_forward.1} parent=1 // pred_fallthru
      _
    // Predicated region
    $region6: #{net_forward.1} parent=1 // pred_check
      _
    $region7: #{net_forward.1} parent=1 // pred_check_branch
      %20 = sbr.rel (0) target = $region9
    $region8: #{net_forward.1} parent=1 // pred_region
      _
    $region9: #{net_forward.1} parent=1 // pred_fallthru
      _
    // Predicated region
    $region10: #{net_forward.1} parent=1 // pred_check
      _
    $region11: #{net_forward.1} parent=1 // pred_check_branch
      %22 = sbr.rel (0) target = $region13
    $region12: #{net_forward.1} parent=1 // pred_region
      _
    $region13: #{net_forward.1} parent=1 // pred_fallthru
      _
    // Predicated region
    $region14: #{net_forward.1} parent=1 // pred_check
      _
    $region15: #{net_forward.1} parent=1 // pred_check_branch
      %24 = sbr.rel (0) target = $region17
    $region16: #{net_forward.1} parent=1 // pred_region
      _
    $region17: #{net_forward.1} parent=1 // pred_fallthru
      _
    // Predicated region
    $region18: #{net_forward.1} parent=1 // pred_check
      _
    $region19: #{net_forward.1} parent=1 // pred_check_branch
      %26 = sbr.rel (0) target = $region21
    $region20: #{net_forward.1} parent=1 // pred_region
      _
    $region21: #{net_forward.1} parent=1 // pred_fallthru
      _
    // Predicated region
    $region22: #{net_forward.1} parent=1 // pred_check
      _
    $region23: #{net_forward.1} parent=1 // pred_check_branch
      %28 = sbr.rel (0) target = $region25
    $region24: #{net_forward.1} parent=1 // pred_region
      _
    $region25: #{net_forward.1} parent=1 // pred_fallthru
      _
    // Predicated region
    $region26: #{net_forward.1} parent=1 // pred_check
      _
    $region27: #{net_forward.1} parent=1 // pred_check_branch
      %30 = sbr.rel (0) target = $region29
    $region28: #{net_forward.1} parent=1 // pred_region
      _
    $region29: #{net_forward.1} parent=1 // pred_fallthru
      _
    // Predicated region
    $region30: #{net_forward.1} parent=1 // pred_check
      _
    $region31: #{net_forward.1} parent=1 // pred_check_branch
      %32 = sbr.rel (0) target = $region33
    $region32: #{net_forward.1} parent=1 // pred_region
      _
    $region33: #{net_forward.1} parent=1 // pred_fallthru
      _
    // Predicated region
    $region34: #{net_forward.1} parent=1 // pred_check
      _
    $region35: #{net_forward.1} parent=1 // pred_check_branch
      %34 = sbr.rel (0) target = $region37
    $region36: #{net_forward.1} parent=1 // pred_region
      _
    $region37: #{net_forward.1} parent=1 // pred_fallthru
      _
    // Predicated region
    $region38: #{net_forward.1} parent=1 // pred_check
      _
    $region39: #{net_forward.1} parent=1 // pred_check_branch
      %36 = sbr.rel (0) target = $region41
    $region40: #{net_forward.1} parent=1 // pred_region
      _
    $region41: #{net_forward.1} parent=1 // pred_fallthru
      _
    // Predicated region
    $region42: #{net_forward.1} parent=1 // pred_check
      _
    $region43: #{net_forward.1} parent=1 // pred_check_branch
      %38 = sbr.rel (0) target = $region45
    $region44: #{net_forward.1} parent=1 // pred_region
      _
    $region45: #{net_forward.1} parent=1 // pred_fallthru
      _
    %v39 = vlaneseq
    %v40 = vshrl.u32 %v39, 7
    %vm41 = vcmp.lt.s32.totalorder %v40, 8
    %v42 = vld [vmem:[%s0] sm:$0xff]
    %v43 = vld [vmem:[%s0 + $0x8] sm:$0xff]
    %v44 = vld [vmem:[%s1] sm:$0xff]
    %v45 = vld [vmem:[%s1 + $0x8] sm:$0xff]
    %v46 = vld [vmem:[%s1 + $0x10] sm:$0xff]
    %v47 = vld [vmem:[%s1 + $0x18] sm:$0xff]
    %v48 = vld [vmem:[%s1 + $0x20] sm:$0xff]
    %v49 = vld [vmem:[%s1 + $0x28] sm:$0xff]
    %v50 = vld [vmem:[%s1 + $0x30] sm:$0xff]
    %v51 = vld [vmem:[%s1 + $0x38] sm:$0xff]
    %v52 = vld [vmem:[%s1 + $0x40] sm:$0xff]
    %v53 = vld [vmem:[%s1 + $0x48] sm:$0xff]
    %v54 = vld [vmem:[%s1 + $0x50] sm:$0xff]
    %v55 = vld [vmem:[%s1 + $0x58] sm:$0xff]
    %v56 = vld [vmem:[%s1 + $0x60] sm:$0xff]
    %v57 = vld [vmem:[%s1 + $0x68] sm:$0xff]
    %v58 = vld [vmem:[%s1 + $0x70] sm:$0xff]
    %v59 = vld [vmem:[%s1 + $0x78] sm:$0xff]
    %v60 = vld [vmem:[%s1 + $0x80] sm:$0xff]
    %v61 = vld [vmem:[%s1 + $0x88] sm:$0xff]
    %v62 = vld [vmem:[%s1 + $0x90] sm:$0xff]
    %v63 = vld [vmem:[%s1 + $0x98] sm:$0xff]
    %v64 = vld [vmem:[%s1 + $0xa0] sm:$0xff]
    %v65 = vld [vmem:[%s1 + $0xa8] sm:$0xff]
    %v66 = vld [vmem:[%s1 + $0xb0] sm:$0xff]
    %v67 = vld [vmem:[%s1 + $0xb8] sm:$0xff]
    %v68 = vld [vmem:[%s1 + $0xc0] sm:$0xff]
    %v69 = vld [vmem:[%s1 + $0xc8] sm:$0xff]
    %v70 = vld [vmem:[%s1 + $0xd0] sm:$0xff]
    %v71 = vld [vmem:[%s1 + $0xd8] sm:$0xff]
    %v72 = vld [vmem:[%s1 + $0xe0] sm:$0xff]
    %v73 = vld [vmem:[%s1 + $0xe8] sm:$0xff]
    %v74 = vld [vmem:[%s1 + $0xf0] sm:$0xff]
    %v75 = vld [vmem:[%s1 + $0xf8] sm:$0xff]
    %v76 = vld [vmem:[%s2] sm:$0x1]
    %v78 = vlaneseq
    %v79 = vshrl.u32 %v78, 7
    %v80 = vsub.s32 0, %v79
    %v81 = vrot.slane %v76, %v80
    %83 = vmatprep.subr.mxu0 0.0
    %84 = vmatpush1.msra.mxu0 %v44
    %85 = vmatprep.subr.mxu0 0.0
    %86 = vmatpush1.msra.mxu0 %v45
    %87 = vmatprep.subr.mxu0 0.0
    %88 = vmatpush1.msra.mxu0 %v46
    %89 = vmatprep.subr.mxu0 0.0
    %90 = vmatpush1.msra.mxu0 %v47
    %91 = vmatprep.subr.mxu0 0.0
    %92 = vmatpush1.msra.mxu0 %v48
    %93 = vmatprep.subr.mxu0 0.0
    %94 = vmatpush1.msra.mxu0 %v49
    %95 = vmatprep.subr.mxu0 0.0
    %96 = vmatpush1.msra.mxu0 %v50
    %97 = vmatprep.subr.mxu0 0.0
    %98 = vmatpush1.msra.mxu0 %v51
    %99 = vmatprep.subr.mxu0 0.0
    %100 = vmatpush1.msra.mxu0 %v52
    %101 = vmatprep.subr.mxu0 0.0
    %102 = vmatpush1.msra.mxu0 %v53
    %103 = vmatprep.subr.mxu0 0.0
    %104 = vmatpush1.msra.mxu0 %v54
    %105 = vmatprep.subr.mxu0 0.0
    %106 = vmatpush1.msra.mxu0 %v55
    %107 = vmatprep.subr.mxu0 0.0
    %108 = vmatpush1.msra.mxu0 %v56
    %109 = vmatprep.subr.mxu0 0.0
    %110 = vmatpush1.msra.mxu0 %v57
    %111 = vmatprep.subr.mxu0 0.0
    %112 = vmatpush1.msra.mxu0 %v58
    %113 = vmatprep.subr.mxu0 0.0
    %114 = vmatpush1.msra.mxu0 %v59
    %115 = vmatprep.subr.mxu0 0.0
    %116 = vmatpush1.msra.mxu0 %v60
    %117 = vmatprep.subr.mxu0 0.0
    %118 = vmatpush1.msra.mxu0 %v61
    %119 = vmatprep.subr.mxu0 0.0
    %120 = vmatpush1.msra.mxu0 %v62
    %121 = vmatprep.subr.mxu0 0.0
    %122 = vmatpush1.msra.mxu0 %v63
    %123 = vmatprep.subr.mxu0 0.0
    %124 = vmatpush1.msra.mxu0 %v64
    %125 = vmatprep.subr.mxu0 0.0
    %126 = vmatpush1.msra.mxu0 %v65
    %127 = vmatprep.subr.mxu0 0.0
    %128 = vmatpush1.msra.mxu0 %v66
    %129 = vmatprep.subr.mxu0 0.0
    %130 = vmatpush1.msra.mxu0 %v67
    %131 = vmatprep.subr.mxu0 0.0
    %132 = vmatpush1.msra.mxu0 %v68
    %133 = vmatprep.subr.mxu0 0.0
    %134 = vmatpush1.msra.mxu0 %v69
    %135 = vmatprep.subr.mxu0 0.0
    %136 = vmatpush1.msra.mxu0 %v70
    %137 = vmatprep.subr.mxu0 0.0
    %138 = vmatpush1.msra.mxu0 %v71
    %139 = vmatprep.subr.mxu0 0.0
    %140 = vmatpush1.msra.mxu0 %v72
    %141 = vmatprep.subr.mxu0 0.0
    %142 = vmatpush1.msra.mxu0 %v73
    %143 = vmatprep.subr.mxu0 0.0
    %144 = vmatpush1.msra.mxu0 %v74
    %145 = vmatprep.subr.mxu0 0.0
    %146 = vmatpush1.msra.mxu0 %v75
    %147 = vmatprep.mubr.f32.mxu0 %v43
    %148 = vmatmul.mubr.f32.gmra.mrb[0].mxu0 %v42
    %v149 = vpop.f32.mrb[0].mxu0
    %v150 = vadd.f32 %v81, %v149
    %v151 = vpop.f32.mrb[0].mxu0
    %152 = vdwg.mxu0
    %v153 = vsel %vm41, 1, 0
    %vm154 = vcmp.eq.s32.totalorder %v153, 1
    %v155 = vsel %vm154, %v150, 0.0
    %v156 = vrot.slane %v155, 4
    %v157 = vadd.f32 %v155, %v156
    %v158 = vrot.slane %v157, 2
    %v159 = vadd.f32 %v157, %v158
    %v160 = vrot.slane %v159, 1
    %v161 = vadd.f32 %v159, %v160
    %v162 = vmul.f32 %v161, 0.125
    %v163 = vmul.f32 %v155, %v155
    %v164 = vrot.slane %v163, 4
    %v165 = vadd.f32 %v163, %v164
    %v166 = vrot.slane %v165, 2
    %v167 = vadd.f32 %v165, %v166
    %v168 = vrot.slane %v167, 1
    %v169 = vadd.f32 %v167, %v168
    %v170 = vmul.f32 %v169, 0.125
    %v171 = vmul.f32 %v162, %v162
    %v172 = vsub.f32 %v170, %v171
    %v173 = vadd.f32 %v172, 1e-05
    %v174 = vrsqrt.pop %v173
    %v175 = vld [vmem:[%s3] sm:$0x1]
    %v176 = vmul.f32 %v174, %v175
    %v177 = vld [vmem:[%s4] sm:$0x1]
    %v178 = vmul.f32 %v162, %v176
    %v179 = vsub.f32 %v177, %v178
    %v180 = vlaneseq
    %v181 = vshrl.u32 %v180, 7
    %v182 = vsub.s32 0, %v181
    %v183 = vrot.slane %v176, %v182
    %v184 = vmul.f32 %v150, %v183
    %v186 = vlaneseq
    %v187 = vshrl.u32 %v186, 7
    %v188 = vsub.s32 0, %v187
    %v189 = vrot.slane %v179, %v188
    %v191 = vadd.f32 %v184, %v189
    %v192 = vmax.f32 %v191, 0.0
    %v193 = vld [vmem:[%s5] sm:$0xff]
    %v194 = vld [vmem:[%s5 + $0x8] sm:$0xff]
    %v195 = vld [vmem:[%s5 + $0x10] sm:$0xff]
    %v196 = vld [vmem:[%s5 + $0x18] sm:$0xff]
    %v197 = vld [vmem:[%s5 + $0x20] sm:$0xff]
    %v198 = vld [vmem:[%s5 + $0x28] sm:$0xff]
    %v199 = vld [vmem:[%s5 + $0x30] sm:$0xff]
    %v200 = vld [vmem:[%s5 + $0x38] sm:$0xff]
    %v201 = vld [vmem:[%s5 + $0x40] sm:$0xff]
    %v202 = vld [vmem:[%s5 + $0x48] sm:$0xff]
    %v203 = vld [vmem:[%s5 + $0x50] sm:$0xff]
    %v204 = vld [vmem:[%s5 + $0x58] sm:$0xff]
    %v205 = vld [vmem:[%s5 + $0x60] sm:$0xff]
    %v206 = vld [vmem:[%s5 + $0x68] sm:$0xff]
    %v207 = vld [vmem:[%s5 + $0x70] sm:$0xff]
    %v208 = vld [vmem:[%s5 + $0x78] sm:$0xff]
    %v209 = vld [vmem:[%s6] sm:$0x1]
    %v211 = vlaneseq
    %v212 = vshrl.u32 %v211, 7
    %v213 = vsub.s32 0, %v212
    %v214 = vrot.slane %v209, %v213
    %216 = vmatprep.subr.mxu0 0.0
    %217 = vmatpush1.msra.mxu0 %v193
    %218 = vmatprep.subr.mxu0 0.0
    %219 = vmatpush1.msra.mxu0 %v194
    %220 = vmatprep.subr.mxu0 0.0
    %221 = vmatpush1.msra.mxu0 %v195
    %222 = vmatprep.subr.mxu0 0.0
    %223 = vmatpush1.msra.mxu0 %v196
    %224 = vmatprep.subr.mxu0 0.0
    %225 = vmatpush1.msra.mxu0 %v197
    %226 = vmatprep.subr.mxu0 0.0
    %227 = vmatpush1.msra.mxu0 %v198
    %228 = vmatprep.subr.mxu0 0.0
    %229 = vmatpush1.msra.mxu0 %v199
    %230 = vmatprep.subr.mxu0 0.0
    %231 = vmatpush1.msra.mxu0 %v200
    %232 = vmatprep.subr.mxu0 0.0
    %233 = vmatpush1.msra.mxu0 %v201
    %234 = vmatprep.subr.mxu0 0.0
    %235 = vmatpush1.msra.mxu0 %v202
    %236 = vmatprep.subr.mxu0 0.0
    %237 = vmatpush1.msra.mxu0 %v203
    %238 = vmatprep.subr.mxu0 0.0
    %239 = vmatpush1.msra.mxu0 %v204
    %240 = vmatprep.subr.mxu0 0.0
    %241 = vmatpush1.msra.mxu0 %v205
    %242 = vmatprep.subr.mxu0 0.0
    %243 = vmatpush1.msra.mxu0 %v206
    %244 = vmatprep.subr.mxu0 0.0
    %245 = vmatpush1.msra.mxu0 %v207
    %246 = vmatprep.subr.mxu0 0.0
    %247 = vmatpush1.msra.mxu0 %v208
    %248 = vmatprep.subr.mxu0 0.0
    %249 = vmatpush1.msra.mxu0 0.0
    %250 = vmatprep.subr.mxu0 0.0
    %251 = vmatpush1.msra.mxu0 0.0
    %252 = vmatprep.subr.mxu0 0.0
    %253 = vmatpush1.msra.mxu0 0.0
    %254 = vmatprep.subr.mxu0 0.0
    %255 = vmatpush1.msra.mxu0 0.0
    %256 = vmatprep.subr.mxu0 0.0
    %257 = vmatpush1.msra.mxu0 0.0
    %258 = vmatprep.subr.mxu0 0.0
    %259 = vmatpush1.msra.mxu0 0.0
    %260 = vmatprep.subr.mxu0 0.0
    %261 = vmatpush1.msra.mxu0 0.0
    %262 = vmatprep.subr.mxu0 0.0
    %263 = vmatpush1.msra.mxu0 0.0
    %264 = vmatprep.subr.mxu0 0.0
    %265 = vmatpush1.msra.mxu0 0.0
    %266 = vmatprep.subr.mxu0 0.0
    %267 = vmatpush1.msra.mxu0 0.0
    %268 = vmatprep.subr.mxu0 0.0
    %269 = vmatpush1.msra.mxu0 0.0
    %270 = vmatprep.subr.mxu0 0.0
    %271 = vmatpush1.msra.mxu0 0.0
    %272 = vmatprep.subr.mxu0 0.0
    %273 = vmatpush1.msra.mxu0 0.0
    %274 = vmatprep.subr.mxu0 0.0
    %275 = vmatpush1.msra.mxu0 0.0
    %276 = vmatprep.subr.mxu0 0.0
    %277 = vmatpush1.msra.mxu0 0.0
    %278 = vmatprep.subr.mxu0 0.0
    %279 = vmatpush1.msra.mxu0 0.0
    %280 = vmatprep.mubr.f32.mxu0 0.0
    %281 = vmatmul.mubr.f32.gmra.mrb[0].mxu0 %v192
    %v282 = vpop.f32.mrb[0].mxu0
    %v283 = vadd.f32 %v214, %v282
    %v284 = vpop.f32.mrb[0].mxu0
    %285 = vdwg.mxu0
    %v286 = vsel %vm154, %v283, 0.0
    %v287 = vrot.slane %v286, 4
    %v288 = vadd.f32 %v286, %v287
    %v289 = vrot.slane %v288, 2
    %v290 = vadd.f32 %v288, %v289
    %v291 = vrot.slane %v290, 1
    %v292 = vadd.f32 %v290, %v291
    %v293 = vmul.f32 %v292, 0.125
    %v294 = vmul.f32 %v286, %v286
    %v295 = vrot.slane %v294, 4
    %v296 = vadd.f32 %v294, %v295
    %v297 = vrot.slane %v296, 2
    %v298 = vadd.f32 %v296, %v297
    %v299 = vrot.slane %v298, 1
    %v300 = vadd.f32 %v298, %v299
    %v301 = vmul.f32 %v300, 0.125
    %v302 = vmul.f32 %v293, %v293
    %v303 = vsub.f32 %v301, %v302
    %v304 = vadd.f32 %v303, 1e-05
    %v305 = vrsqrt.pop %v304
    %v306 = vld [vmem:[%s7] sm:$0x1]
    %v307 = vmul.f32 %v305, %v306
    %v308 = vld [vmem:[%s8] sm:$0x1]
    %v309 = vmul.f32 %v293, %v307
    %v310 = vsub.f32 %v308, %v309
    %v311 = vlaneseq
    %v312 = vshrl.u32 %v311, 7
    %v313 = vsub.s32 0, %v312
    %v314 = vrot.slane %v307, %v313
    %v315 = vmul.f32 %v283, %v314
    %v317 = vlaneseq
    %v318 = vshrl.u32 %v317, 7
    %v319 = vsub.s32 0, %v318
    %v320 = vrot.slane %v310, %v319
    %v322 = vadd.f32 %v315, %v320
    %v323 = vmax.f32 %v322, 0.0
    %v324 = vld [vmem:[%s9] sm:$0xff]
    %v325 = vld [vmem:[%s9 + $0x8] sm:$0xff]
    %v326 = vld [vmem:[%s9 + $0x10] sm:$0xff]
    %v327 = vld [vmem:[%s9 + $0x18] sm:$0xff]
    %v328 = vld [vmem:[%s9 + $0x20] sm:$0xff]
    %v329 = vld [vmem:[%s9 + $0x28] sm:$0xff]
    %v330 = vld [vmem:[%s9 + $0x30] sm:$0xff]
    %v331 = vld [vmem:[%s9 + $0x38] sm:$0xff]
    %v332 = vld [vmem:[%s9 + $0x40] sm:$0xff]
    %v333 = vld [vmem:[%s9 + $0x48] sm:$0xff]
    %v334 = vld [vmem:[%s9 + $0x50] sm:$0xff]
    %v335 = vld [vmem:[%s9 + $0x58] sm:$0xff]
    %v336 = vld [vmem:[%s9 + $0x60] sm:$0xff]
    %v337 = vld [vmem:[%s9 + $0x68] sm:$0xff]
    %v338 = vld [vmem:[%s9 + $0x70] sm:$0xff]
    %v339 = vld [vmem:[%s9 + $0x78] sm:$0xff]
    %v340 = vld [vmem:[%s10] sm:$0x1]
    %v342 = vlaneseq
    %v343 = vshrl.u32 %v342, 7
    %v344 = vsub.s32 0, %v343
    %v345 = vrot.slane %v340, %v344
    %347 = vmatprep.subr.mxu0 0.0
    %348 = vmatpush1.msra.mxu0 %v324
    %349 = vmatprep.subr.mxu0 0.0
    %350 = vmatpush1.msra.mxu0 %v325
    %351 = vmatprep.subr.mxu0 0.0
    %352 = vmatpush1.msra.mxu0 %v326
    %353 = vmatprep.subr.mxu0 0.0
    %354 = vmatpush1.msra.mxu0 %v327
    %355 = vmatprep.subr.mxu0 0.0
    %356 = vmatpush1.msra.mxu0 %v328
    %357 = vmatprep.subr.mxu0 0.0
    %358 = vmatpush1.msra.mxu0 %v329
    %359 = vmatprep.subr.mxu0 0.0
    %360 = vmatpush1.msra.mxu0 %v330
    %361 = vmatprep.subr.mxu0 0.0
    %362 = vmatpush1.msra.mxu0 %v331
    %363 = vmatprep.subr.mxu0 0.0
    %364 = vmatpush1.msra.mxu0 %v332
    %365 = vmatprep.subr.mxu0 0.0
    %366 = vmatpush1.msra.mxu0 %v333
    %367 = vmatprep.subr.mxu0 0.0
    %368 = vmatpush1.msra.mxu0 %v334
    %369 = vmatprep.subr.mxu0 0.0
    %370 = vmatpush1.msra.mxu0 %v335
    %371 = vmatprep.subr.mxu0 0.0
    %372 = vmatpush1.msra.mxu0 %v336
    %373 = vmatprep.subr.mxu0 0.0
    %374 = vmatpush1.msra.mxu0 %v337
    %375 = vmatprep.subr.mxu0 0.0
    %376 = vmatpush1.msra.mxu0 %v338
    %377 = vmatprep.subr.mxu0 0.0
    %378 = vmatpush1.msra.mxu0 %v339
    %379 = vmatprep.subr.mxu0 0.0
    %380 = vmatpush1.msra.mxu0 0.0
    %381 = vmatprep.subr.mxu0 0.0
    %382 = vmatpush1.msra.mxu0 0.0
    %383 = vmatprep.subr.mxu0 0.0
    %384 = vmatpush1.msra.mxu0 0.0
    %385 = vmatprep.subr.mxu0 0.0
    %386 = vmatpush1.msra.mxu0 0.0
    %387 = vmatprep.subr.mxu0 0.0
    %388 = vmatpush1.msra.mxu0 0.0
    %389 = vmatprep.subr.mxu0 0.0
    %390 = vmatpush1.msra.mxu0 0.0
    %391 = vmatprep.subr.mxu0 0.0
    %392 = vmatpush1.msra.mxu0 0.0
    %393 = vmatprep.subr.mxu0 0.0
    %394 = vmatpush1.msra.mxu0 0.0
    %395 = vmatprep.subr.mxu0 0.0
    %396 = vmatpush1.msra.mxu0 0.0
    %397 = vmatprep.subr.mxu0 0.0
    %398 = vmatpush1.msra.mxu0 0.0
    %399 = vmatprep.subr.mxu0 0.0
    %400 = vmatpush1.msra.mxu0 0.0
    %401 = vmatprep.subr.mxu0 0.0
    %402 = vmatpush1.msra.mxu0 0.0
    %403 = vmatprep.subr.mxu0 0.0
    %404 = vmatpush1.msra.mxu0 0.0
    %405 = vmatprep.subr.mxu0 0.0
    %406 = vmatpush1.msra.mxu0 0.0
    %407 = vmatprep.subr.mxu0 0.0
    %408 = vmatpush1.msra.mxu0 0.0
    %409 = vmatprep.subr.mxu0 0.0
    %410 = vmatpush1.msra.mxu0 0.0
    %411 = vmatprep.mubr.f32.mxu0 0.0
    %412 = vmatmul.mubr.f32.gmra.mrb[0].mxu0 %v323
    %v413 = vpop.f32.mrb[0].mxu0
    %v414 = vadd.f32 %v345, %v413
    %v415 = vpop.f32.mrb[0].mxu0
    %416 = vdwg.mxu0
    %v417 = vmax.f32 %v414, 0.0
    %v418 = vlaneseq
    %v419 = vand.u32 %v418, 127
    %vm420 = vcmp.lt.s32.totalorder %v419, 10
    %v421 = vsel %vm420, 1, 0
    %vm422 = vcmp.eq.s32.totalorder %v421, 1
    %v423 = vsel %vm422, %v417, -inf
    %424 = vmax.xlane.f32.xlu0 %v423
    %v425 = vpop.xlane.xlu0 %424
    %v426 = vsub.f32 %v423, %v425
    %v427 = vmul.f32 %v426, 1.442695
    %v428 = vpow.pop %v427
    %429 = vadd.xlane.f32.xlu0 %v428
    %v430 = vpop.xlane.xlu0 %429
    %v431 = vlog2.pop %v430
    %v432 = vmul.f32 %v431, 0.6931472
    %v433 = vadd.f32 %v432, %v425
    %v434 = vsub.f32 %v423, %v433
    %v435 = vsel %vm422, %v434, 0.0
    %436 = vst [vmem:[#allocation2] sm:$0xff] %v435
    // Predicated region
    $region46: #{net_forward.1} parent=1 // pred_check
      _
    $region47: #{net_forward.1} parent=1 // pred_check_branch
      %438 = sbr.rel (0) target = $region49
    $region48: #{net_forward.1} parent=1 // pred_region
      %s440 = ssub.s32 128, 128
      %441 = vsyncadd [#allocation3], %s440
      %s443 = sshll.u32 [#allocation2], 4
      %s444 = int_to_ptr.vmem [resolvable:$true] %s443
      %446 = dma.vmem_to_hbm [thread:$0]  %s444, 128, %s11, [#allocation3]
    $region49: #{net_forward.1} parent=1 // pred_fallthru
      _
    // Predicated region
    $region50: #{net_forward.1} parent=1 // pred_check
      _
    $region51: #{net_forward.1} parent=1 // pred_check_branch
      %448 = sbr.rel (0) target = $region53
    $region52: #{net_forward.1} parent=1 // pred_region
      %449 = dma.done [#allocation3], 128
    $region53: #{net_forward.1} parent=1 // pred_fallthru
      _
    %450 = vsyncpa [#allocation3], 1

</llo_original>
